<compile_context>
chip_gen: v7x
topology: tpu7x:2x2x1
jax: 0.10.0
libtpu: 0.0.40
codegen_flags: <defaults>
</compile_context>

<pallas_src>
import functools
import math

import jax
import jax.numpy as jnp
from jax import lax
from jax.experimental import pallas as pl
from jax.experimental.pallas import tpu as pltpu


def _mask_k_tail(xv, wv, k, tk, d_in):
    # Zero the out-of-range K columns/rows of the (possibly overhanging) last
    # K block.  Both operands are masked so unspecified pad data (which may be
    # NaN/Inf bit patterns) can never reach the accumulator (0 * NaN = NaN).
    limit = d_in - k * tk                      # == tk on all but the last step
    col = lax.broadcasted_iota(jnp.int32, xv.shape, 1)
    row = lax.broadcasted_iota(jnp.int32, wv.shape, 0)
    xv = jnp.where(col < limit, xv, jnp.zeros_like(xv))
    wv = jnp.where(row < limit, wv, jnp.zeros_like(wv))
    return xv, wv


def _linear_kernel_direct(x_ref, w_ref, b_ref, o_ref, *, need_k_mask, d_in, tk):
    """f32-output path: accumulate straight into the K-resident output block."""
    k = pl.program_id(2)

    @pl.when(k == 0)
    def _():
        # Initialize with the bias instead of zeros -> no separate bias add.
        o_ref[...] = jnp.broadcast_to(b_ref[...], o_ref.shape)

    xv = x_ref[...]
    wv = w_ref[...]
    if need_k_mask:                            # compile-time switch
        xv, wv = _mask_k_tail(xv, wv, k, tk, d_in)

    o_ref[...] += jnp.dot(xv, wv, preferred_element_type=jnp.float32)


def _linear_kernel_acc(x_ref, w_ref, b_ref, o_ref, acc_ref, *, need_k_mask, d_in, tk):
    """Narrow-output path (e.g. bf16 out): f32 scratch accumulator + final cast."""
    k = pl.program_id(2)

    @pl.when(k == 0)
    def _():
        acc_ref[...] = jnp.broadcast_to(b_ref[...], acc_ref.shape)

    xv = x_ref[...]
    wv = w_ref[...]
    if need_k_mask:
        xv, wv = _mask_k_tail(xv, wv, k, tk, d_in)

    acc_ref[...] += jnp.dot(xv, wv, preferred_element_type=jnp.float32)

    @pl.when(k == pl.num_programs(2) - 1)
    def _():
        o_ref[...] = acc_ref[...].astype(o_ref.dtype)


def linear(x, weight, bias=None, *, tm=512, tn=512, tk=1024,
           operand_dtype=None, out_dtype=None,
           weight_resident_max_bytes=4 << 20):
    """y = x @ weight.T + bias, matching torch.nn.Linear forward.

    x:      (..., d_in)
    weight: (d_out, d_in)  (nn.Linear layout)
    bias:   (d_out,) or None
    operand_dtype: optional dtype (e.g. jnp.bfloat16) the MXU operands are
        STREAMED from HBM in (cast once in the wrapper; f32 accumulation kept).
        None keeps exact f32 semantics.
    """
    *lead, d_in = x.shape
    d_out, d_in_w = weight.shape
    assert d_in_w == d_in, (weight.shape, d_in)
    m = math.prod(lead) if lead else 1
    out_dtype = jnp.dtype(out_dtype if out_dtype is not None else x.dtype)

    # One-time transpose of the static weight to (d_in, d_out): plain
    # (tm,tk)@(tk,tn) contraction on the MXU, no per-step XLU transpose risk.
    w_t = weight.T
    if operand_dtype is not None:
        x = x.astype(operand_dtype)
        w_t = w_t.astype(operand_dtype)
    x2 = x.reshape(m, d_in)

    if bias is None:
        bias = jnp.zeros((d_out,), dtype=jnp.float32)
    b2 = bias.astype(jnp.float32).reshape(1, d_out)

    op_bytes = x2.dtype.itemsize
    out_bytes = out_dtype.itemsize

    # If the whole (cast) weight fits comfortably in VMEM, keep it resident:
    # full-K/full-N block whose index never changes -> DMA'd once, never
    # re-streamed per M tile (HBM traffic drops to x + W + out, each once).
    if d_in * d_out * op_bytes <= weight_resident_max_bytes:
        tk = d_in
        tn = d_out

    # Clamp tiles to the full dims at small shapes (single grid step, output
    # stores as lane-dense as the problem allows).  A block is legal if it
    # equals the full dim or respects (8, 128) granularity.
    tm = m if m < tm else tm
    tn = d_out if d_out < tn else tn
    tk = d_in if d_in < tk else tk
    # TODO(synk): for mid-size shapes that fit one (tm, tn) block, splitting M
    # so grid_M*grid_N >= 2 would let v7x's second TensorCore help.

    need_k_mask = (d_in % tk) != 0
    use_acc = out_dtype != jnp.dtype(jnp.float32)

    grid = (pl.cdiv(m, tm), pl.cdiv(d_out, tn), pl.cdiv(d_in, tk))

    # Advisory cost for XLA's scheduler around the custom call.
    cost = pl.CostEstimate(
        flops=2 * m * d_out * d_in,
        transcendentals=0,
        bytes_accessed=(m * d_in + d_in * d_out) * op_bytes
                       + m * d_out * out_bytes + d_out * 4)

    # VMEM sizing: double-buffered x/W/out tiles (+ f32 acc when used).
    # Defaults use ~10 MiB (f32) / ~6 MiB (bf16) -> fine on v5e/v6e/v7x; the
    # explicit limit just gives headroom if larger tiles are requested.
    acc_bytes = tm * tn * 4 if use_acc else 0
    vmem_need = (2 * (tm * tk + tk * tn) * op_bytes
                 + 2 * tm * tn * out_bytes + 2 * tn * 4 + acc_bytes)
    vmem_limit = int(max(32 << 20, min(96 << 20, int(1.5 * vmem_need))))

    if use_acc:
        kernel = functools.partial(_linear_kernel_acc,
                                   need_k_mask=need_k_mask, d_in=d_in, tk=tk)
        scratch = [pltpu.VMEM((tm, tn), jnp.float32)]
    else:
        kernel = functools.partial(_linear_kernel_direct,
                                   need_k_mask=need_k_mask, d_in=d_in, tk=tk)
        scratch = []

    out = pl.pallas_call(
        kernel,
        out_shape=jax.ShapeDtypeStruct((m, d_out), out_dtype),
        grid=grid,
        in_specs=[
            pl.BlockSpec((tm, tk), lambda i, j, k: (i, k)),   # x tile
            pl.BlockSpec((tk, tn), lambda i, j, k: (k, j)),   # W^T tile (d_in, d_out)
            pl.BlockSpec((1, tn), lambda i, j, k: (0, j)),    # bias tile
        ],
        out_specs=pl.BlockSpec((tm, tn), lambda i, j, k: (i, j)),
        scratch_shapes=scratch,
        compiler_params=pltpu.CompilerParams(
            dimension_semantics=("parallel", "parallel", "arbitrary"),
            vmem_limit_bytes=vmem_limit),
        cost_estimate=cost,
    )(x2, w_t, b2)
    return out.reshape(*lead, d_out)


# ------------------------------- Parameter init ---------------------------------
def init_params(key, d_in, d_out):
    kw, kb = jax.random.split(key, 2)
    # nn.init.xavier_normal on a (d_out, d_in) weight: std = sqrt(2 / (fan_in + fan_out))
    std = math.sqrt(2.0 / (d_in + d_out))
    weight = std * jax.random.normal(kw, (d_out, d_in), dtype=jnp.float32)
    # nn.Linear default bias init: U(-1/sqrt(fan_in), 1/sqrt(fan_in))
    bound = 1.0 / math.sqrt(d_in)
    bias = jax.random.uniform(kb, (d_out,), dtype=jnp.float32,
                              minval=-bound, maxval=bound)
    return weight, bias


if __name__ == "__main__":
    # Small shapes consistent with the module's forward: batch=2, seq=8, hidden=32.
    d_in, d_out = 32, 32
    mb, seq = 2, 8

    key = jax.random.PRNGKey(0)
    kx, kp = jax.random.split(key, 2)
    x = jax.random.normal(kx, (mb, seq, d_in), dtype=jnp.float32)
    weight, bias = init_params(kp, d_in, d_out)

    # Exact f32 path (matches torch.nn.Linear f32 numerics).
    y = linear(x, weight, bias)
    jax.block_until_ready(y)
    y_ref = x @ weight.T + bias
    assert y.shape == (mb, seq, d_out)
    assert jnp.allclose(y, y_ref, atol=1e-5, rtol=1e-5), float(jnp.max(jnp.abs(y - y_ref)))

    # bf16-streamed operand path (perf: half HBM bytes, f32 accumulation);
    # numerics differ from f32 so the tolerance is widened accordingly.
    y_bf = linear(x, weight, bias, operand_dtype=jnp.bfloat16)
    jax.block_until_ready(y_bf)
    assert jnp.allclose(y_bf, y_ref, atol=5e-2, rtol=5e-2), float(jnp.max(jnp.abs(y_bf - y_ref)))

    # Multi-tile grid with non-divisible K: exercises the K-tail mask and the
    # accumulate-into-output path across several grid steps.
    d_in2, d_out2, m2 = 200, 256, 256
    k2x, k2p = jax.random.split(jax.random.PRNGKey(1), 2)
    x2 = jax.random.normal(k2x, (m2, d_in2), dtype=jnp.float32)
    w2, b2 = init_params(k2p, d_in2, d_out2)
    y2 = linear(x2, w2, b2, tm=128, tn=128, tk=128, weight_resident_max_bytes=0)
    jax.block_until_ready(y2)
    y2_ref = x2 @ w2.T + b2
    assert jnp.allclose(y2, y2_ref, atol=2e-3, rtol=2e-3), float(jnp.max(jnp.abs(y2 - y2_ref)))

    print("KERNEL_OK")
</pallas_src>

<mosaic_0001>
module attributes {stable_mosaic.version = 11 : i64} {
  func.func @_linear_kernel_direct(%arg0: i32, %arg1: i32, %arg2: i32, %arg3: memref<16x32xf32, #tpu.memory_space<vmem>>, %arg4: memref<32x32xf32, #tpu.memory_space<vmem>>, %arg5: memref<1x32xf32, #tpu.memory_space<vmem>>, %arg6: memref<16x32xf32, #tpu.memory_space<vmem>>) attributes {dimension_semantics = [#tpu.dimension_semantics<parallel>, #tpu.dimension_semantics<parallel>, #tpu.dimension_semantics<arbitrary>], iteration_bounds = array<i64: 1, 1, 1>, scalar_prefetch = 0 : i64, scratch_operands = 0 : i64, tpu.core_type = #tpu.core_type<tc>, window_params = [{transform_indices = @transform_0, window_bounds = array<i64: 16, 32>}, {transform_indices = @transform_1, window_bounds = array<i64: 32, 32>}, {transform_indices = @transform_2, window_bounds = array<i64: 1, 32>}, {transform_indices = @transform_3, window_bounds = array<i64: 16, 32>}]} {
    %c0_i32 = arith.constant 0 : i32
    %0 = arith.cmpi eq, %arg2, %c0_i32 : i32
    %1 = arith.extui %0 : i1 to i32
    %c0_i32_0 = arith.constant 0 : i32
    %2 = arith.cmpi ne, %1, %c0_i32_0 : i32
    scf.if %2 {
      %c0_8 = arith.constant 0 : index
      %c0_9 = arith.constant 0 : index
      %9 = vector.load %arg5[%c0_8, %c0_9] : memref<1x32xf32, #tpu.memory_space<vmem>>, vector<1x32xf32>
      %10 = vector.shape_cast %9 : vector<1x32xf32> to vector<1x32xf32>
      %11 = vector.broadcast %10 : vector<1x32xf32> to vector<16x32xf32>
      %c0_10 = arith.constant 0 : index
      %c0_11 = arith.constant 0 : index
      %12 = vector.load %arg6[%c0_10, %c0_11] : memref<16x32xf32, #tpu.memory_space<vmem>>, vector<16x32xf32>
      tpu.vector_store %arg6[%c0_10, %c0_11], %11 {strides = array<i32>} : memref<16x32xf32, #tpu.memory_space<vmem>>, vector<16x32xf32>,
    } else {
    }
    %c0 = arith.constant 0 : index
    %c0_1 = arith.constant 0 : index
    %3 = vector.load %arg3[%c0, %c0_1] : memref<16x32xf32, #tpu.memory_space<vmem>>, vector<16x32xf32>
    %c0_2 = arith.constant 0 : index
    %c0_3 = arith.constant 0 : index
    %4 = vector.load %arg4[%c0_2, %c0_3] : memref<32x32xf32, #tpu.memory_space<vmem>>, vector<32x32xf32>
    %c0_4 = arith.constant 0 : index
    %c0_5 = arith.constant 0 : index
    %5 = vector.load %arg6[%c0_4, %c0_5] : memref<16x32xf32, #tpu.memory_space<vmem>>, vector<16x32xf32>
    %cst = arith.constant dense<0.000000e+00> : vector<16x32xf32>
    %6 = tpu.matmul %3, %4, %cst {dimension_numbers = #tpu.dot_dimension_numbers<[1], [0], [0], [1], [0, 0, 1, 1], [], []>} : vector<16x32xf32>, vector<32x32xf32>, vector<16x32xf32> -> vector<16x32xf32>
    %7 = arith.addf %5, %6 : vector<16x32xf32>
    %c0_6 = arith.constant 0 : index
    %c0_7 = arith.constant 0 : index
    %8 = vector.load %arg6[%c0_6, %c0_7] : memref<16x32xf32, #tpu.memory_space<vmem>>, vector<16x32xf32>
    tpu.vector_store %arg6[%c0_6, %c0_7], %7 {strides = array<i32>} : memref<16x32xf32, #tpu.memory_space<vmem>>, vector<16x32xf32>,
    return
  }
  func.func @transform_0(%arg0: i32, %arg1: i32, %arg2: i32) -> (i32, i32) {
    %c0_i32 = arith.constant 0 : i32
    return %arg0, %arg2 : i32, i32
  }
  func.func @transform_1(%arg0: i32, %arg1: i32, %arg2: i32) -> (i32, i32) {
    %c0_i32 = arith.constant 0 : i32
    return %arg2, %arg1 : i32, i32
  }
  func.func @transform_2(%arg0: i32, %arg1: i32, %arg2: i32) -> (i32, i32) {
    %c0_i32 = arith.constant 0 : i32
    %c0_i32_0 = arith.constant 0 : i32
    return %c0_i32, %arg1 : i32, i32
  }
  func.func @transform_3(%arg0: i32, %arg1: i32, %arg2: i32) -> (i32, i32) {
    %c0_i32 = arith.constant 0 : i32
    return %arg0, %arg1 : i32, i32
  }
}

</mosaic_0001>

<llo_original>
// kernel: tpu_custom_call.1
$region0: #{tpu_custom_call.1}
  #allocation0 [shape = 'u32[]', space=smem, size = 0x4, offset = 0x4, fixed_abs, tag = 'smem constant byte address 0x4 - core index']
  #allocation1 [shape = 'u32[144,128]{1,0:T(1,128)}', space=vmem, size = 0x12000, scoped, tag = 'internal scratch']
  %s0 = inlined_call_operand.hbm [shape: f32[16,32], index: 0, kind: input, shape index: {}]
  %s1 = inlined_call_operand.hbm [shape: f32[32,32], index: 1, kind: input, shape index: {}]
  %s2 = inlined_call_operand.vmem [shape: f32[1,32], index: 2, kind: input, shape index: {}]
  %s3 = inlined_call_operand.hbm [shape: f32[16,32], index: 3, kind: output, shape index: {}]
  %s4 = sld [smem:[#allocation0]]
  $region34: #{tpu_custom_call.1} parent=0
    _
  %s6 = ssub.s32 1, %s4
  %s7 = scalar_select 0, %s6, %s4
  $region1: #{tpu_custom_call.1} parent=0
    #allocation2 [shape = 'u8[8192]{0}', space=vmem, size = 0x2000, scoped, tag = 'input window, operand 0, single buffered']
    #allocation3 [shape = 's32[1]{0}', space=sflag, size = 0x4, scoped, tag = 'scoped memory for tpu_custom_call.1']
    #allocation4 [shape = 's32[1]{0}', space=sflag, size = 0x4, scoped, tag = 'scoped memory for tpu_custom_call.1']
    #allocation5 [shape = 'u8[16384]{0}', space=vmem, size = 0x4000, scoped, tag = 'input window, operand 1, single buffered']
    #allocation6 [shape = 's32[1]{0}', space=sflag, size = 0x4, scoped, tag = 'scoped memory for tpu_custom_call.1']
    #allocation7 [shape = 'u8[8192]{0}', space=vmem, size = 0x2000, scoped, tag = 'output window, operand 0, single buffered']
    %8 = vsyncpa [#allocation3], 0
    %9 = vsyncpa [#allocation6], 0
    %10 = vsyncpa [#allocation4], 0
    // Predicated region
    $region2: #{tpu_custom_call.1} parent=1 // pred_check
      _
    $region3: #{tpu_custom_call.1} parent=1 // pred_check_branch
      %12 = sbr.rel (0) target = $region5
    $region4: #{tpu_custom_call.1} parent=1 // pred_region
      %s14 = ssub.s32 256, 256
      %15 = vsyncadd [#allocation3], %s14
      %s16 = sshll.u32 [#allocation2], 4
      %s17 = int_to_ptr.vmem [resolvable:$true] %s16
      %22 = dma.hbm_to_vmem [thread:$0]  %s0, 256, %s17, [#allocation3], 128, 128, 8
    $region5: #{tpu_custom_call.1} parent=1 // pred_fallthru
      _
    // Predicated region
    $region6: #{tpu_custom_call.1} parent=1 // pred_check
      _
    $region7: #{tpu_custom_call.1} parent=1 // pred_check_branch
      %24 = sbr.rel (0) target = $region9
    $region8: #{tpu_custom_call.1} parent=1 // pred_region
      %s26 = ssub.s32 512, 512
      %27 = vsyncadd [#allocation6], %s26
      %s28 = sshll.u32 [#allocation5], 4
      %s29 = int_to_ptr.vmem [resolvable:$true] %s28
      %34 = dma.hbm_to_vmem [thread:$0]  %s1, 512, %s29, [#allocation6], 128, 128, 8
    $region9: #{tpu_custom_call.1} parent=1 // pred_fallthru
      _
    // Predicated region
    $region10: #{tpu_custom_call.1} parent=1 // pred_check
      _
    $region11: #{tpu_custom_call.1} parent=1 // pred_check_branch
      %36 = sbr.rel (0) target = $region13
    $region12: #{tpu_custom_call.1} parent=1 // pred_region
      _
    $region13: #{tpu_custom_call.1} parent=1 // pred_fallthru
      _
    // Predicated region
    $region14: #{tpu_custom_call.1} parent=1 // pred_check
      _
    $region15: #{tpu_custom_call.1} parent=1 // pred_check_branch
      %38 = sbr.rel (0) target = $region17
    $region16: #{tpu_custom_call.1} parent=1 // pred_region
      %39 = dma.done [#allocation3], 256
    $region17: #{tpu_custom_call.1} parent=1 // pred_fallthru
      _
    // Predicated region
    $region18: #{tpu_custom_call.1} parent=1 // pred_check
      _
    $region19: #{tpu_custom_call.1} parent=1 // pred_check_branch
      %41 = sbr.rel (0) target = $region21
    $region20: #{tpu_custom_call.1} parent=1 // pred_region
      %42 = dma.done [#allocation6], 512
    $region21: #{tpu_custom_call.1} parent=1 // pred_fallthru
      _
    %p43 = scmp.eq.s32.totalorder 0, 0
    // Predicated region
    $region22: #{tpu_custom_call.1} parent=1 // pred_check
      %p44 = pneg %p43
    $region23: #{tpu_custom_call.1} parent=1 // pred_check_branch
      %46 = sbr.rel (%p44) target = $region25
    $region24: #{tpu_custom_call.1} parent=1 // pred_region
      %v47 = vld [vmem:[%s2] sm:$0x1]
      %v49 = vlaneseq
      %v50 = vshrl.u32 %v49, 7
      %v51 = vsub.s32 0, %v50
      %v52 = vrot.slane %v47, %v51
      %vm54 = vcmask 261120
      %55 = vst.msk [vmem:[#allocation7] sm:$0xff] %vm54, %v52
      %56 = vst.msk [vmem:[#allocation7 + $0x8] sm:$0xff] %vm54, %v52
    $region25: #{tpu_custom_call.1} parent=1 // pred_fallthru
      _
    %v57 = vld [vmem:[#allocation2] sm:$0xff]
    %v58 = vld [vmem:[#allocation2 + $0x8] sm:$0xff]
    %v59 = vld [vmem:[#allocation5] sm:$0xff]
    %v60 = vld [vmem:[#allocation5 + $0x8] sm:$0xff]
    %v61 = vld [vmem:[#allocation5 + $0x10] sm:$0xff]
    %v62 = vld [vmem:[#allocation5 + $0x18] sm:$0xff]
    %v63 = vld [vmem:[#allocation7] sm:$0xff]
    %v64 = vld [vmem:[#allocation7 + $0x8] sm:$0xff]
    %vm65 = vcmask 261120
    %v67 = vsel %vm65, %v57, 0
    %v70 = vsel %vm65, %v58, 0
    %72 = vmatprep.subr.mxu0 0.0
    %73 = vmatpush1.msra.mxu0 %v59
    %74 = vmatprep.subr.mxu0 0.0
    %75 = vmatpush1.msra.mxu0 %v60
    %76 = vmatprep.subr.mxu0 0.0
    %77 = vmatpush1.msra.mxu0 %v61
    %78 = vmatprep.subr.mxu0 0.0
    %79 = vmatpush1.msra.mxu0 %v62
    %80 = vmatprep.subr.mxu0 0.0
    %81 = vmatpush1.msra.mxu0 0.0
    %82 = vmatprep.subr.mxu0 0.0
    %83 = vmatpush1.msra.mxu0 0.0
    %84 = vmatprep.subr.mxu0 0.0
    %85 = vmatpush1.msra.mxu0 0.0
    %86 = vmatprep.subr.mxu0 0.0
    %87 = vmatpush1.msra.mxu0 0.0
    %88 = vmatprep.subr.mxu0 0.0
    %89 = vmatpush1.msra.mxu0 0.0
    %90 = vmatprep.subr.mxu0 0.0
    %91 = vmatpush1.msra.mxu0 0.0
    %92 = vmatprep.subr.mxu0 0.0
    %93 = vmatpush1.msra.mxu0 0.0
    %94 = vmatprep.subr.mxu0 0.0
    %95 = vmatpush1.msra.mxu0 0.0
    %96 = vmatprep.subr.mxu0 0.0
    %97 = vmatpush1.msra.mxu0 0.0
    %98 = vmatprep.subr.mxu0 0.0
    %99 = vmatpush1.msra.mxu0 0.0
    %100 = vmatprep.subr.mxu0 0.0
    %101 = vmatpush1.msra.mxu0 0.0
    %102 = vmatprep.subr.mxu0 0.0
    %103 = vmatpush1.msra.mxu0 0.0
    %104 = vmatprep.subr.mxu0 0.0
    %105 = vmatpush1.msra.mxu0 0.0
    %106 = vmatprep.subr.mxu0 0.0
    %107 = vmatpush1.msra.mxu0 0.0
    %108 = vmatprep.subr.mxu0 0.0
    %109 = vmatpush1.msra.mxu0 0.0
    %110 = vmatprep.subr.mxu0 0.0
    %111 = vmatpush1.msra.mxu0 0.0
    %112 = vmatprep.subr.mxu0 0.0
    %113 = vmatpush1.msra.mxu0 0.0
    %114 = vmatprep.subr.mxu0 0.0
    %115 = vmatpush1.msra.mxu0 0.0
    %116 = vmatprep.subr.mxu0 0.0
    %117 = vmatpush1.msra.mxu0 0.0
    %118 = vmatprep.subr.mxu0 0.0
    %119 = vmatpush1.msra.mxu0 0.0
    %120 = vmatprep.subr.mxu0 0.0
    %121 = vmatpush1.msra.mxu0 0.0
    %122 = vmatprep.subr.mxu0 0.0
    %123 = vmatpush1.msra.mxu0 0.0
    %124 = vmatprep.subr.mxu0 0.0
    %125 = vmatpush1.msra.mxu0 0.0
    %126 = vmatprep.subr.mxu0 0.0
    %127 = vmatpush1.msra.mxu0 0.0
    %128 = vmatprep.subr.mxu0 0.0
    %129 = vmatpush1.msra.mxu0 0.0
    %130 = vmatprep.subr.mxu0 0.0
    %131 = vmatpush1.msra.mxu0 0.0
    %132 = vmatprep.subr.mxu0 0.0
    %133 = vmatpush1.msra.mxu0 0.0
    %134 = vmatprep.subr.mxu0 0.0
    %135 = vmatpush1.msra.mxu0 0.0
    %136 = vmatprep.mubr.f32.mxu0 0.0
    %137 = vmatmul.mubr.f32.gmra.mrb[0].mxu0 %v67
    %v138 = vpop.f32.mrb[0].mxu0
    %v139 = vadd.f32 0.0, %v138
    %v140 = vpop.f32.mrb[0].mxu0
    %141 = vmatprep.mubr.f32.mxu0 0.0
    %142 = vmatmul.mubr.f32.gmra.mrb[0].mxu0 %v70
    %v143 = vpop.f32.mrb[0].mxu0
    %v144 = vadd.f32 0.0, %v143
    %v145 = vpop.f32.mrb[0].mxu0
    %146 = vdwg.mxu0
    %v147 = vadd.f32 %v63, %v139
    %v148 = vadd.f32 %v64, %v144
    %149 = vst.msk [vmem:[#allocation7] sm:$0xff] %vm65, %v147
    %150 = vst.msk [vmem:[#allocation7 + $0x8] sm:$0xff] %vm65, %v148
    // Predicated region
    $region26: #{tpu_custom_call.1} parent=1 // pred_check
      _
    $region27: #{tpu_custom_call.1} parent=1 // pred_check_branch
      %152 = sbr.rel (0) target = $region29
    $region28: #{tpu_custom_call.1} parent=1 // pred_region
      %s154 = ssub.s32 256, 256
      %155 = vsyncadd [#allocation4], %s154
      %s156 = sshll.u32 [#allocation7], 4
      %s157 = int_to_ptr.vmem [resolvable:$true] %s156
      %162 = dma.vmem_to_hbm [thread:$0]  %s157, 256, %s3, [#allocation4], 128, 128, 8
    $region29: #{tpu_custom_call.1} parent=1 // pred_fallthru
      _
    // Predicated region
    $region30: #{tpu_custom_call.1} parent=1 // pred_check
      _
    $region31: #{tpu_custom_call.1} parent=1 // pred_check_branch
      %164 = sbr.rel (0) target = $region33
    $region32: #{tpu_custom_call.1} parent=1 // pred_region
      %165 = dma.done [#allocation4], 256
    $region33: #{tpu_custom_call.1} parent=1 // pred_fallthru
      _
    %166 = vsyncpa [#allocation3], 1
    %167 = vsyncpa [#allocation6], 1
    %168 = vsyncpa [#allocation4], 1

</llo_original>
